<compile_context>
chip_gen: v6e
topology: v6e:2x2x1
jax: 0.10.0
libtpu: 0.0.40
codegen_flags: <defaults>
</compile_context>

<pallas_src>
import jax
import jax.numpy as jnp
from jax.experimental import pallas as pl
from jax.experimental.pallas import tpu as pltpu


def _round_up(x, m):
    return (x + m - 1) // m * m


def _pick_tile_f(F, D):
    """Pick the hidden-dim tile. Full F when the (bf16, double-buffered) weights
    for both matmuls are small; otherwise the largest lane-aligned divisor."""
    weight_bytes_double_buffered = 2 * (2 * D * F * 2)  # 2 matrices, bf16, 2 buffers
    if weight_bytes_double_buffered <= 8 * 1024 * 1024 or F % 128 != 0:
        return F
    for t in (512, 384, 256, 128):
        if F % t == 0:
            return t
    return F


# ---------------------------------------------------------------------------
# Kernel bodies
# ---------------------------------------------------------------------------
def ffn_kernel_single(x_ref, w1_ref, b1_ref, w2_ref, b2_ref, o_ref):
    """Fully fused FFN for one row tile (whole hidden dim in VMEM)."""
    x_bf = x_ref[...].astype(jnp.bfloat16)
    h = jnp.dot(x_bf, w1_ref[...], preferred_element_type=jnp.float32)
    h = jnp.maximum(h + b1_ref[...], 0.0)
    # TODO(synk): ffn_drop (nn.Dropout) is identity at inference; no RNG mask applied.
    out = jnp.dot(h.astype(jnp.bfloat16), w2_ref[...],
                  preferred_element_type=jnp.float32)
    # add_identity=True, identity defaults to x; residual add in f32.
    o_ref[...] = (x_ref[...].astype(jnp.float32) + out + b2_ref[...]).astype(o_ref.dtype)


def ffn_kernel_chunked(x_ref, w1_ref, b1_ref, w2_ref, b2_ref, o_ref, acc_ref):
    """One (row-tile, hidden-chunk) grid step; hidden dim is the reduction axis."""
    k = pl.program_id(1)

    @pl.when(k == 0)
    def _():
        acc_ref[...] = jnp.zeros_like(acc_ref)

    x_bf = x_ref[...].astype(jnp.bfloat16)
    h = jnp.dot(x_bf, w1_ref[...], preferred_element_type=jnp.float32)
    h = jnp.maximum(h + b1_ref[...], 0.0)
    # TODO(synk): ffn_drop (nn.Dropout) is identity at inference; no RNG mask applied.
    acc_ref[...] += jnp.dot(h.astype(jnp.bfloat16), w2_ref[...],
                            preferred_element_type=jnp.float32)

    @pl.when(k == pl.num_programs(1) - 1)
    def _():
        o_ref[...] = (
            x_ref[...].astype(jnp.float32) + acc_ref[...] + b2_ref[...]
        ).astype(o_ref.dtype)


# ---------------------------------------------------------------------------
# Wrapper
# ---------------------------------------------------------------------------
def ffn_forward(x, w1, b1, w2, b2, *, tile_m=None, tile_f=None):
    """x: (N, D) float32; w1: (D, F); b1: (F,)|(1,F); w2: (F, D); b2: (D,)|(1,D)."""
    N, D = x.shape
    F = w1.shape[1]

    # Row tile: large tiles amortize per-step overhead & fill MXU rows.
    if tile_m is None:
        tile_m = min(512, _round_up(N, 8))
    n_pad = _round_up(N, tile_m)
    x_p = jnp.pad(x, ((0, n_pad - N), (0, 0))) if n_pad != N else x

    if tile_f is None:
        tile_f = _pick_tile_f(F, D)
    assert F % tile_f == 0
    assert tile_f == F or tile_f % 128 == 0, "hidden tile must be lane-aligned"
    n_chunks = F // tile_f

    # bf16 weights: native MXU dtype, halves HBM traffic / VMEM footprint.
    w1b = w1.astype(jnp.bfloat16)
    w2b = w2.astype(jnp.bfloat16)
    b1f = jnp.asarray(b1, jnp.float32).reshape(1, F)
    b2f = jnp.asarray(b2, jnp.float32).reshape(1, D)

    flops = 4 * n_pad * D * F  # two matmuls, 2*M*K*N each
    bytes_accessed = (
        x_p.size * 4 + w1b.size * 2 + w2b.size * 2
        + b1f.size * 4 + b2f.size * 4 + n_pad * D * 4
    )
    cost = pl.CostEstimate(flops=flops, transcendentals=0,
                           bytes_accessed=bytes_accessed)

    if n_chunks == 1:
        # Fast path: whole hidden dim resident, no accumulator scratch.
        out = pl.pallas_call(
            ffn_kernel_single,
            out_shape=jax.ShapeDtypeStruct((n_pad, D), x.dtype),
            grid=(n_pad // tile_m,),
            in_specs=[
                pl.BlockSpec((tile_m, D), lambda i: (i, 0)),  # x row tile
                pl.BlockSpec((D, F), lambda i: (0, 0)),       # W1 (resident)
                pl.BlockSpec((1, F), lambda i: (0, 0)),        # b1
                pl.BlockSpec((F, D), lambda i: (0, 0)),        # W2 (resident)
                pl.BlockSpec((1, D), lambda i: (0, 0)),        # b2
            ],
            out_specs=pl.BlockSpec((tile_m, D), lambda i: (i, 0)),
            compiler_params=pltpu.CompilerParams(
                dimension_semantics=("parallel",),
                vmem_limit_bytes=32 * 1024 * 1024,
            ),
            cost_estimate=cost,
        )(x_p, w1b, b1f, w2b, b2f)
    else:
        out = pl.pallas_call(
            ffn_kernel_chunked,
            out_shape=jax.ShapeDtypeStruct((n_pad, D), x.dtype),
            grid=(n_pad // tile_m, n_chunks),
            in_specs=[
                pl.BlockSpec((tile_m, D), lambda i, k: (i, 0)),   # x row tile
                pl.BlockSpec((D, tile_f), lambda i, k: (0, k)),   # W1 hidden chunk
                pl.BlockSpec((1, tile_f), lambda i, k: (0, k)),   # b1 hidden chunk
                pl.BlockSpec((tile_f, D), lambda i, k: (k, 0)),   # W2 hidden chunk
                pl.BlockSpec((1, D), lambda i, k: (0, 0)),        # b2
            ],
            out_specs=pl.BlockSpec((tile_m, D), lambda i, k: (i, 0)),
            scratch_shapes=[pltpu.VMEM((tile_m, D), jnp.float32)],
            compiler_params=pltpu.CompilerParams(
                dimension_semantics=("parallel", "arbitrary"),
                vmem_limit_bytes=32 * 1024 * 1024,
            ),
            cost_estimate=cost,
        )(x_p, w1b, b1f, w2b, b2f)

    return out[:N] if n_pad != N else out


# ---------------------------------------------------------------------------
# References
# ---------------------------------------------------------------------------
def reference_ffn_f32(x, w1, b1, w2, b2):
    h = jnp.maximum(x @ w1 + b1.reshape(1, -1), 0.0)
    out = h @ w2 + b2.reshape(1, -1)
    return x + out


def reference_ffn_bf16(x, w1, b1, w2, b2):
    """Mimics the kernel's bf16-operand / f32-accumulate MXU path exactly."""
    xb = x.astype(jnp.bfloat16)
    h = jnp.dot(xb, w1.astype(jnp.bfloat16), preferred_element_type=jnp.float32)
    h = jnp.maximum(h + b1.reshape(1, -1).astype(jnp.float32), 0.0)
    out = jnp.dot(h.astype(jnp.bfloat16), w2.astype(jnp.bfloat16),
                  preferred_element_type=jnp.float32)
    return x + out + b2.reshape(1, -1).astype(jnp.float32)


if __name__ == "__main__":
    # Small shapes consistent with the module: FFN(embed_dims=32, feedforward_channels=64)
    batch, seq = 2, 8
    embed_dims = 32
    feedforward_channels = 64

    key = jax.random.PRNGKey(0)
    kx, kw1, kb1, kw2, kb2 = jax.random.split(key, 5)

    # Deterministic synthetic parameters (lora_rank=0 -> plain Linear layers).
    x = jax.random.normal(kx, (batch, seq, embed_dims), dtype=jnp.float32)
    w1 = jax.random.normal(kw1, (embed_dims, feedforward_channels), jnp.float32) * 0.05
    b1 = jax.random.normal(kb1, (1, feedforward_channels), jnp.float32) * 0.05
    w2 = jax.random.normal(kw2, (feedforward_channels, embed_dims), jnp.float32) * 0.05
    b2 = jax.random.normal(kb2, (1, embed_dims), jnp.float32) * 0.05

    # Flatten (batch, seq) -> rows for the kernel, restore after.
    x2d = x.reshape(batch * seq, embed_dims)
    out2d = ffn_forward(x2d, w1, b1, w2, b2)
    out = out2d.reshape(batch, seq, embed_dims)
    jax.block_until_ready(out)

    ref_mxu = reference_ffn_bf16(x2d, w1, b1, w2, b2).reshape(batch, seq, embed_dims)
    ref_f32 = reference_ffn_f32(x2d, w1, b1, w2, b2).reshape(batch, seq, embed_dims)

    assert jnp.allclose(out, ref_mxu, atol=1e-4, rtol=1e-4), \
        "mismatch vs bf16-matmul reference (fused path)"
    assert jnp.allclose(out, ref_f32, atol=3e-2, rtol=3e-2), \
        "mismatch vs f32 reference (bf16 rounding tolerance, fused path)"

    # Also exercise the hidden-dim-chunked (accumulator) path with a forced tile.
    F2 = 256
    kw3, kb3, kw4, kb4 = jax.random.split(kb2, 4)
    w1c = jax.random.normal(kw3, (embed_dims, F2), jnp.float32) * 0.05
    b1c = jax.random.normal(kb3, (1, F2), jnp.float32) * 0.05
    w2c = jax.random.normal(kw4, (F2, embed_dims), jnp.float32) * 0.05
    b2c = jax.random.normal(kb4, (1, embed_dims), jnp.float32) * 0.05
    out_c = ffn_forward(x2d, w1c, b1c, w2c, b2c, tile_f=128)
    jax.block_until_ready(out_c)
    ref_c = reference_ffn_bf16(x2d, w1c, b1c, w2c, b2c)
    assert jnp.allclose(out_c, ref_c, atol=1e-4, rtol=1e-4), \
        "mismatch vs bf16-matmul reference (chunked path)"

    print("KERNEL_OK")
</pallas_src>

<mosaic_0001>
module attributes {stable_mosaic.version = 11 : i64} {
  func.func @ffn_kernel_single(%arg0: i32, %arg1: memref<16x32xf32, #tpu.memory_space<vmem>>, %arg2: memref<32x64xbf16, #tpu.memory_space<vmem>>, %arg3: memref<1x64xf32, #tpu.memory_space<vmem>>, %arg4: memref<64x32xbf16, #tpu.memory_space<vmem>>, %arg5: memref<1x32xf32, #tpu.memory_space<vmem>>, %arg6: memref<16x32xf32, #tpu.memory_space<vmem>>) attributes {dimension_semantics = [#tpu.dimension_semantics<parallel>], iteration_bounds = array<i64: 1>, scalar_prefetch = 0 : i64, scratch_operands = 0 : i64, tpu.core_type = #tpu.core_type<tc>, window_params = [{transform_indices = @transform_0, window_bounds = array<i64: 16, 32>}, {pipeline_mode = #tpu.pipeline_mode<synchronous>, transform_indices = @transform_1, window_bounds = array<i64: 32, 64>}, {pipeline_mode = #tpu.pipeline_mode<synchronous>, transform_indices = @transform_2, window_bounds = array<i64: 1, 64>}, {pipeline_mode = #tpu.pipeline_mode<synchronous>, transform_indices = @transform_3, window_bounds = array<i64: 64, 32>}, {pipeline_mode = #tpu.pipeline_mode<synchronous>, transform_indices = @transform_4, window_bounds = array<i64: 1, 32>}, {transform_indices = @transform_5, window_bounds = array<i64: 16, 32>}]} {
    %c0 = arith.constant 0 : index
    %c0_0 = arith.constant 0 : index
    %0 = vector.load %arg1[%c0, %c0_0] : memref<16x32xf32, #tpu.memory_space<vmem>>, vector<16x32xf32>
    %1 = arith.truncf %0 : vector<16x32xf32> to vector<16x32xbf16>
    %c0_1 = arith.constant 0 : index
    %c0_2 = arith.constant 0 : index
    %2 = vector.load %arg2[%c0_1, %c0_2] : memref<32x64xbf16, #tpu.memory_space<vmem>>, vector<32x64xbf16>
    %cst = arith.constant dense<0.000000e+00> : vector<16x64xf32>
    %3 = tpu.matmul %1, %2, %cst {dimension_numbers = #tpu.dot_dimension_numbers<[1], [0], [0], [1], [0, 0, 1, 1], [], []>} : vector<16x32xbf16>, vector<32x64xbf16>, vector<16x64xf32> -> vector<16x64xf32>
    %c0_3 = arith.constant 0 : index
    %c0_4 = arith.constant 0 : index
    %4 = vector.load %arg3[%c0_3, %c0_4] : memref<1x64xf32, #tpu.memory_space<vmem>>, vector<1x64xf32>
    %5 = vector.broadcast %4 : vector<1x64xf32> to vector<16x64xf32>
    %6 = arith.addf %3, %5 : vector<16x64xf32>
    %cst_5 = arith.constant 0.000000e+00 : f32
    %7 = vector.broadcast %cst_5 : f32 to vector<16x64xf32>
    %8 = arith.maximumf %6, %7 : vector<16x64xf32>
    %9 = arith.truncf %8 : vector<16x64xf32> to vector<16x64xbf16>
    %c0_6 = arith.constant 0 : index
    %c0_7 = arith.constant 0 : index
    %10 = vector.load %arg4[%c0_6, %c0_7] : memref<64x32xbf16, #tpu.memory_space<vmem>>, vector<64x32xbf16>
    %cst_8 = arith.constant dense<0.000000e+00> : vector<16x32xf32>
    %11 = tpu.matmul %9, %10, %cst_8 {dimension_numbers = #tpu.dot_dimension_numbers<[1], [0], [0], [1], [0, 0, 1, 1], [], []>} : vector<16x64xbf16>, vector<64x32xbf16>, vector<16x32xf32> -> vector<16x32xf32>
    %c0_9 = arith.constant 0 : index
    %c0_10 = arith.constant 0 : index
    %12 = vector.load %arg1[%c0_9, %c0_10] : memref<16x32xf32, #tpu.memory_space<vmem>>, vector<16x32xf32>
    %13 = arith.addf %12, %11 : vector<16x32xf32>
    %c0_11 = arith.constant 0 : index
    %c0_12 = arith.constant 0 : index
    %14 = vector.load %arg5[%c0_11, %c0_12] : memref<1x32xf32, #tpu.memory_space<vmem>>, vector<1x32xf32>
    %15 = vector.broadcast %14 : vector<1x32xf32> to vector<16x32xf32>
    %16 = arith.addf %13, %15 : vector<16x32xf32>
    %c0_13 = arith.constant 0 : index
    %c0_14 = arith.constant 0 : index
    %17 = vector.load %arg6[%c0_13, %c0_14] : memref<16x32xf32, #tpu.memory_space<vmem>>, vector<16x32xf32>
    tpu.vector_store %arg6[%c0_13, %c0_14], %16 {strides = array<i32>} : memref<16x32xf32, #tpu.memory_space<vmem>>, vector<16x32xf32>,
    return
  }
  func.func @transform_0(%arg0: i32) -> (i32, i32) {
    %c0_i32 = arith.constant 0 : i32
    %c0_i32_0 = arith.constant 0 : i32
    return %arg0, %c0_i32 : i32, i32
  }
  func.func @transform_1(%arg0: i32) -> (i32, i32) {
    %c0_i32 = arith.constant 0 : i32
    %c0_i32_0 = arith.constant 0 : i32
    %c0_i32_1 = arith.constant 0 : i32
    return %c0_i32, %c0_i32_0 : i32, i32
  }
  func.func @transform_2(%arg0: i32) -> (i32, i32) {
    %c0_i32 = arith.constant 0 : i32
    %c0_i32_0 = arith.constant 0 : i32
    %c0_i32_1 = arith.constant 0 : i32
    return %c0_i32, %c0_i32_0 : i32, i32
  }
  func.func @transform_3(%arg0: i32) -> (i32, i32) {
    %c0_i32 = arith.constant 0 : i32
    %c0_i32_0 = arith.constant 0 : i32
    %c0_i32_1 = arith.constant 0 : i32
    return %c0_i32, %c0_i32_0 : i32, i32
  }
  func.func @transform_4(%arg0: i32) -> (i32, i32) {
    %c0_i32 = arith.constant 0 : i32
    %c0_i32_0 = arith.constant 0 : i32
    %c0_i32_1 = arith.constant 0 : i32
    return %c0_i32, %c0_i32_0 : i32, i32
  }
  func.func @transform_5(%arg0: i32) -> (i32, i32) {
    %c0_i32 = arith.constant 0 : i32
    %c0_i32_0 = arith.constant 0 : i32
    return %arg0, %c0_i32 : i32, i32
  }
}

</mosaic_0001>

<llo_original>
// kernel: tpu_custom_call.1
$region0: #{tpu_custom_call.1}
  #allocation0 [shape = 'u32[]', space=smem, size = 0x4, offset = 0x4, fixed_abs, tag = 'smem constant byte address 0x4 - core index']
  #allocation1 [shape = 'u32[144,128]{1,0:T(1,128)}', space=vmem, size = 0x12000, scoped, tag = 'internal scratch']
  %s0 = inlined_call_operand.vmem [shape: f32[16,32], index: 0, kind: input, shape index: {}]
  %s1 = inlined_call_operand.vmem [shape: bf16[32,64], index: 1, kind: input, shape index: {}]
  %s2 = inlined_call_operand.vmem [shape: f32[1,64], index: 2, kind: input, shape index: {}]
  %s3 = inlined_call_operand.vmem [shape: bf16[64,32], index: 3, kind: input, shape index: {}]
  %s4 = inlined_call_operand.vmem [shape: f32[1,32], index: 4, kind: input, shape index: {}]
  %s5 = inlined_call_operand.hbm [shape: f32[16,32], index: 5, kind: output, shape index: {}]
  %s6 = sld [smem:[#allocation0]]
  $region30: #{tpu_custom_call.1} parent=0
    _
  %s8 = ssub.s32 1, %s6
  %s9 = scalar_select 0, %s8, %s6
  $region1: #{tpu_custom_call.1} parent=0
    #allocation2 [shape = 'u8[8192]{0}', space=vmem, size = 0x2000, scoped, tag = 'output window, operand 0, single buffered']
    #allocation3 [shape = 's32[1]{0}', space=sflag, size = 0x4, scoped, tag = 'scoped memory for tpu_custom_call.1']
    %10 = vsyncpa [#allocation3], 0
    // Predicated region
    $region2: #{tpu_custom_call.1} parent=1 // pred_check
      _
    $region3: #{tpu_custom_call.1} parent=1 // pred_check_branch
      %12 = sbr.rel (0) target = $region5
    $region4: #{tpu_custom_call.1} parent=1 // pred_region
      _
    $region5: #{tpu_custom_call.1} parent=1 // pred_fallthru
      _
    // Predicated region
    $region6: #{tpu_custom_call.1} parent=1 // pred_check
      _
    $region7: #{tpu_custom_call.1} parent=1 // pred_check_branch
      %14 = sbr.rel (0) target = $region9
    $region8: #{tpu_custom_call.1} parent=1 // pred_region
      _
    $region9: #{tpu_custom_call.1} parent=1 // pred_fallthru
      _
    // Predicated region
    $region10: #{tpu_custom_call.1} parent=1 // pred_check
      _
    $region11: #{tpu_custom_call.1} parent=1 // pred_check_branch
      %16 = sbr.rel (0) target = $region13
    $region12: #{tpu_custom_call.1} parent=1 // pred_region
      _
    $region13: #{tpu_custom_call.1} parent=1 // pred_fallthru
      _
    // Predicated region
    $region14: #{tpu_custom_call.1} parent=1 // pred_check
      _
    $region15: #{tpu_custom_call.1} parent=1 // pred_check_branch
      %18 = sbr.rel (0) target = $region17
    $region16: #{tpu_custom_call.1} parent=1 // pred_region
      _
    $region17: #{tpu_custom_call.1} parent=1 // pred_fallthru
      _
    // Predicated region
    $region18: #{tpu_custom_call.1} parent=1 // pred_check
      _
    $region19: #{tpu_custom_call.1} parent=1 // pred_check_branch
      %20 = sbr.rel (0) target = $region21
    $region20: #{tpu_custom_call.1} parent=1 // pred_region
      _
    $region21: #{tpu_custom_call.1} parent=1 // pred_fallthru
      _
    %v22 = vld [vmem:[%s0] sm:$0xff]
    %v23 = vld [vmem:[%s0 + $0x8] sm:$0xff]
    %v24 = vpack.c.bf16 %v23, %v22
    %v25 = vld [vmem:[%s1] sm:$0xf]
    %v26 = vld [vmem:[%s1 + $0x4] sm:$0xf]
    %v27 = vld [vmem:[%s1 + $0x8] sm:$0xf]
    %v28 = vld [vmem:[%s1 + $0xc] sm:$0xf]
    %v29 = vld [vmem:[%s2] sm:$0x1]
    %v31 = vlaneseq
    %v32 = vshrl.u32 %v31, 7
    %v33 = vsub.s32 0, %v32
    %v34 = vrot.slane %v29, %v33
    %v40 = vunpack.c.l.b16 %v25
    %v41 = vunpack.c.l.b16 %v26
    %v42 = vunpack.c.l.b16 %v27
    %v43 = vunpack.c.l.b16 %v28
    %v44 = vpack.c.b16 %v41, %v40
    %v45 = vpack.c.b16 %v43, %v42
    %vm48 = vcmask 261120
    %v50 = vsel %vm48, %v24, 0
    %52 = vmatprep.subr.bf16.mxu0 0
    %53 = vmatpush1.bf16.msra.mxu0 0
    %54 = vmatprep.subr.bf16.mxu0 0
    %55 = vmatpush1.bf16.msra.mxu0 0
    %56 = vmatprep.subr.bf16.mxu0 0
    %57 = vmatpush1.bf16.msra.mxu0 0
    %58 = vmatprep.subr.bf16.mxu0 0
    %59 = vmatpush1.bf16.msra.mxu0 0
    %60 = vmatprep.subr.bf16.mxu0 0
    %61 = vmatpush1.bf16.msra.mxu0 0
    %62 = vmatprep.subr.bf16.mxu0 0
    %63 = vmatpush1.bf16.msra.mxu0 0
    %64 = vmatprep.subr.bf16.mxu0 0
    %65 = vmatpush1.bf16.msra.mxu0 %v45
    %66 = vmatprep.subr.bf16.mxu0 0
    %67 = vmatpush1.bf16.msra.mxu0 %v44
    %68 = vmatprep.subr.bf16.mxu0 0
    %69 = vmatpush2.bf16.msra.mxu0 0
    %70 = vmatprep.subr.bf16.mxu0 0
    %71 = vmatpush2.bf16.msra.mxu0 0
    %72 = vmatprep.subr.bf16.mxu0 0
    %73 = vmatpush2.bf16.msra.mxu0 0
    %74 = vmatprep.subr.bf16.mxu0 0
    %75 = vmatpush2.bf16.msra.mxu0 0
    %76 = vmatprep.subr.bf16.mxu0 0
    %77 = vmatpush2.bf16.msra.mxu0 0
    %78 = vmatprep.subr.bf16.mxu0 0
    %79 = vmatpush2.bf16.msra.mxu0 0
    %80 = vmatprep.subr.bf16.mxu0 0
    %81 = vmatpush2.bf16.msra.mxu0 0
    %82 = vmatprep.subr.bf16.mxu0 0
    %83 = vmatpush2.bf16.msra.mxu0 0
    %84 = vmatprep.mubr.bf16.mxu0 0
    %85 = vmatmul.mubr.bf16.gmra.mxu0 %v50
    %v86 = vpop.f32.mrf.mxu0
    %v87 = vadd.f32 %v34, %v86
    %v88 = vpop.f32.mrf.mxu0
    %v89 = vpop.f32.mrf.mxu0
    %v90 = vadd.f32 %v34, %v89
    %v91 = vpop.f32.mrf.mxu0
    %92 = vdwg.mxu0
    %v93 = vmax.f32 %v87, 0.0
    %v94 = vmax.f32 %v90, 0.0
    %v95 = vpack.c.bf16 %v94, %v93
    %v96 = vld [vmem:[%s3] sm:$0xf]
    %v97 = vld [vmem:[%s3 + $0x4] sm:$0xf]
    %v98 = vld [vmem:[%s3 + $0x8] sm:$0xf]
    %v99 = vld [vmem:[%s3 + $0xc] sm:$0xf]
    %v100 = vld [vmem:[%s3 + $0x10] sm:$0xf]
    %v101 = vld [vmem:[%s3 + $0x14] sm:$0xf]
    %v102 = vld [vmem:[%s3 + $0x18] sm:$0xf]
    %v103 = vld [vmem:[%s3 + $0x1c] sm:$0xf]
    %v112 = vunpack.c.l.b16 %v96
    %v113 = vunpack.c.l.b16 %v97
    %v114 = vunpack.c.l.b16 %v98
    %v115 = vunpack.c.l.b16 %v99
    %v116 = vunpack.c.l.b16 %v100
    %v117 = vunpack.c.l.b16 %v101
    %v118 = vunpack.c.l.b16 %v102
    %v119 = vunpack.c.l.b16 %v103
    %v120 = vpack.c.b16 %v113, %v112
    %v121 = vpack.c.b16 %v115, %v114
    %v122 = vpack.c.b16 %v117, %v116
    %v123 = vpack.c.b16 %v119, %v118
    %vm128 = vcmask 523264
    %v130 = vsel %vm128, %v95, 0
    %132 = vmatprep.subr.bf16.mxu0 0
    %133 = vmatpush1.bf16.msra.mxu0 0
    %134 = vmatprep.subr.bf16.mxu0 0
    %135 = vmatpush1.bf16.msra.mxu0 0
    %136 = vmatprep.subr.bf16.mxu0 0
    %137 = vmatpush1.bf16.msra.mxu0 0
    %138 = vmatprep.subr.bf16.mxu0 0
    %139 = vmatpush1.bf16.msra.mxu0 0
    %140 = vmatprep.subr.bf16.mxu0 0
    %141 = vmatpush1.bf16.msra.mxu0 %v123
    %142 = vmatprep.subr.bf16.mxu0 0
    %143 = vmatpush1.bf16.msra.mxu0 %v122
    %144 = vmatprep.subr.bf16.mxu0 0
    %145 = vmatpush1.bf16.msra.mxu0 %v121
    %146 = vmatprep.subr.bf16.mxu0 0
    %147 = vmatpush1.bf16.msra.mxu0 %v120
    %148 = vmatprep.subr.bf16.mxu0 0
    %149 = vmatpush2.bf16.msra.mxu0 0
    %150 = vmatprep.subr.bf16.mxu0 0
    %151 = vmatpush2.bf16.msra.mxu0 0
    %152 = vmatprep.subr.bf16.mxu0 0
    %153 = vmatpush2.bf16.msra.mxu0 0
    %154 = vmatprep.subr.bf16.mxu0 0
    %155 = vmatpush2.bf16.msra.mxu0 0
    %156 = vmatprep.subr.bf16.mxu0 0
    %157 = vmatpush2.bf16.msra.mxu0 0
    %158 = vmatprep.subr.bf16.mxu0 0
    %159 = vmatpush2.bf16.msra.mxu0 0
    %160 = vmatprep.subr.bf16.mxu0 0
    %161 = vmatpush2.bf16.msra.mxu0 0
    %162 = vmatprep.subr.bf16.mxu0 0
    %163 = vmatpush2.bf16.msra.mxu0 0
    %164 = vmatprep.mubr.bf16.mxu0 0
    %165 = vmatmul.mubr.bf16.gmra.mxu0 %v130
    %v166 = vpop.f32.mrf.mxu0
    %v167 = vadd.f32 0.0, %v166
    %v168 = vpop.f32.mrf.mxu0
    %v169 = vpop.f32.mrf.mxu0
    %v170 = vadd.f32 0.0, %v169
    %v171 = vpop.f32.mrf.mxu0
    %172 = vdwg.mxu0
    %v173 = vadd.f32 %v22, %v167
    %v174 = vadd.f32 %v23, %v170
    %v175 = vld [vmem:[%s4] sm:$0x1]
    %v177 = vlaneseq
    %v178 = vshrl.u32 %v177, 7
    %v179 = vsub.s32 0, %v178
    %v180 = vrot.slane %v175, %v179
    %v182 = vadd.f32 %v173, %v180
    %v183 = vadd.f32 %v174, %v180
    %184 = vst.msk [vmem:[#allocation2] sm:$0xff] %vm48, %v182
    %185 = vst.msk [vmem:[#allocation2 + $0x8] sm:$0xff] %vm48, %v183
    // Predicated region
    $region22: #{tpu_custom_call.1} parent=1 // pred_check
      _
    $region23: #{tpu_custom_call.1} parent=1 // pred_check_branch
      %187 = sbr.rel (0) target = $region25
    $region24: #{tpu_custom_call.1} parent=1 // pred_region
      %s189 = ssub.s32 256, 256
      %190 = vsyncadd [#allocation3], %s189
      %s191 = sshll.u32 [#allocation2], 4
      %s192 = int_to_ptr.vmem [resolvable:$true] %s191
      %197 = dma.vmem_to_hbm [thread:$0]  %s192, 256, %s5, [#allocation3], 128, 128, 8
    $region25: #{tpu_custom_call.1} parent=1 // pred_fallthru
      _
    // Predicated region
    $region26: #{tpu_custom_call.1} parent=1 // pred_check
      _
    $region27: #{tpu_custom_call.1} parent=1 // pred_check_branch
      %199 = sbr.rel (0) target = $region29
    $region28: #{tpu_custom_call.1} parent=1 // pred_region
      %200 = dma.done [#allocation3], 256
    $region29: #{tpu_custom_call.1} parent=1 // pred_fallthru
      _
    %201 = vsyncpa [#allocation3], 1

</llo_original>
